<compile_context>
chip_gen: v7x
topology: tpu7x:2x2x1
jax: 0.10.0
libtpu: 0.0.40
codegen_flags: <defaults>
</compile_context>

<pallas_src>
import jax
import jax.numpy as jnp
from jax.experimental import pallas as pl
from jax.experimental.pallas import tpu as pltpu


def _decoder_kernel(hxc_ref, enc_ref,
                    wa1h_ref, wa1e_ref, ba1_ref, wa2_ref,
                    wc_ref, whx_ref, blstm_ref,
                    hc_out_ref):
    """One grid step == one block of TB batch elements.

    hxc_ref : (TB, 2H+Din)  packed [h | x | c]
    enc_ref : (TB, S, H)    encoder outputs
    """
    TB, S, H = enc_ref.shape
    K = hxc_ref.shape[1]
    Din = K - 2 * H

    h = hxc_ref[:, 0:H]              # (TB, H)
    hx = hxc_ref[:, 0:H + Din]       # (TB, H+Din)  [h | x]
    c = hxc_ref[:, H + Din:K]        # (TB, H)
    enc = enc_ref[...]               # (TB, S, H)

    # ---- attention: energy = W2 @ tanh(W1 @ [h_rep ; enc] + b1), softmax over seq ----
    # split-weight form of the concat; hidden part folded with the bias.
    th = jnp.dot(h, wa1h_ref[...], preferred_element_type=jnp.float32) + ba1_ref[...]   # (TB, H)
    te = jnp.dot(enc.reshape(TB * S, H), wa1e_ref[...],
                 preferred_element_type=jnp.float32)                                     # (TB*S, H)
    a = jnp.tanh(te.reshape(TB, S, H) + th[:, None, :])                                  # (TB, S, H)

    # energy reduction on the VPU/XLU (multiply by the (1,H) W2 row + lane reduce);
    # attn bias b2 dropped: a constant shift of every logit is a no-op under softmax.
    energy = jnp.sum(a * wa2_ref[...][None, :, :], axis=-1, keepdims=True)               # (TB, S, 1)

    m = jnp.max(energy, axis=1, keepdims=True)
    e = jnp.exp(energy - m)
    w = e / jnp.sum(e, axis=1, keepdims=True)                                            # exact divide
    ctx = jnp.sum(w * enc, axis=1)                                                       # (TB, H)

    # ---- single LSTM step, split gate matmuls (PyTorch gate order i, f, g, o) ----
    gates = (jnp.dot(ctx, wc_ref[...], preferred_element_type=jnp.float32)
             + jnp.dot(hx, whx_ref[...], preferred_element_type=jnp.float32)
             + blstm_ref[...])                                                           # (TB, 4H)

    i_g = jax.nn.sigmoid(gates[:, 0 * H:1 * H])
    f_g = jax.nn.sigmoid(gates[:, 1 * H:2 * H])
    g_g = jnp.tanh(gates[:, 2 * H:3 * H])
    o_g = jax.nn.sigmoid(gates[:, 3 * H:4 * H])

    c_new = f_g * c + i_g * g_g
    h_new = o_g * jnp.tanh(c_new)

    # single lane-dense (TB, 2H) output slab: [h_new | c_new]
    hc_out_ref[...] = jnp.concatenate([h_new, c_new], axis=-1).astype(hc_out_ref.dtype)


def init_params(key, input_size, hidden_size):
    """Deterministic init mirroring PyTorch default uniform(-1/sqrt(fan_in), +1/sqrt(fan_in))."""
    H = hidden_size
    ks = jax.random.split(key, 8)
    u = lambda k, shape, bound: jax.random.uniform(k, shape, jnp.float32, -bound, bound)
    k1 = 1.0 / (2 * H) ** 0.5
    k2 = 1.0 / H ** 0.5
    kl = 1.0 / H ** 0.5
    return dict(
        attn_w1=u(ks[0], (H, 2 * H), k1),            # nn.Linear(2H, H).weight
        attn_b1=u(ks[1], (H,), k1),
        attn_w2=u(ks[2], (1, H), k2),                # nn.Linear(H, 1).weight
        attn_b2=u(ks[3], (1,), k2),
        w_ih=u(ks[4], (4 * H, input_size + H), kl),  # lstm.weight_ih_l0
        w_hh=u(ks[5], (4 * H, H), kl),               # lstm.weight_hh_l0
        b_ih=u(ks[6], (4 * H,), kl),
        b_hh=u(ks[7], (4 * H,), kl),
    )


def prepack_params(params, input_size):
    """One-time weight re-packing (hoisted out of the per-decode-step path)."""
    H = params['attn_b1'].shape[0]
    Din = input_size
    f32 = jnp.float32
    w1 = params['attn_w1'].astype(f32)                     # (H, 2H), cat order [hidden, enc]
    wih = params['w_ih'].astype(f32)                       # (4H, Din + H), cat order [x, ctx]
    whh = params['w_hh'].astype(f32)                       # (4H, H)
    return dict(
        wa1h=w1[:, :H].T,                                  # (H, H)    hidden part of W1^T
        wa1e=w1[:, H:].T,                                  # (H, H)    encoder part of W1^T
        ba1=params['attn_b1'].reshape(1, H).astype(f32),   # (1, H)
        wa2=params['attn_w2'].reshape(1, H).astype(f32),   # (1, H)    W2 as a row (attn_b2 dropped)
        wc=wih[:, Din:].T,                                 # (H, 4H)   ctx gate weight
        # [h | x] gate weight; row order must match the host-side packing of hxc:
        whx=jnp.concatenate([whh.T, wih[:, :Din].T], axis=0),           # (H+Din, 4H)
        b_lstm=(params['b_ih'] + params['b_hh']).reshape(1, 4 * H).astype(f32),  # (1, 4H)
    )


@jax.jit
def decoder_step(packed, inp, hidden, cell, enc):
    """inp: (B,1,Din)  hidden/cell: (1,B,H)  enc: (B,S,H)
       -> dec_output (B,1,H), new_hidden (1,B,H), new_cell (1,B,H)"""
    B, S, H = enc.shape
    Din = inp.shape[-1]
    f32 = jnp.float32

    x = inp.reshape(B, Din).astype(f32)
    h = hidden[0].astype(f32)     # (B, H)
    c = cell[0].astype(f32)       # (B, H)
    enc = enc.astype(f32)

    # Fold x (a 1-lane block) and c into the hidden slab: one lane-dense input DMA.
    hxc = jnp.concatenate([h, x, c], axis=1)               # (B, 2H+Din), order [h | x | c]

    # Whole batch per grid step at small B (1-TC v5e/v6e: a multi-block grid is pure serial
    # overhead); split into two "parallel" blocks only when B is large enough to feed both
    # v7x TensorCores with (8,128)-aligned blocks.
    TB = B // 2 if (B >= 16 and B % 16 == 0) else B
    nb = B // TB
    K = 2 * H + Din

    # VMEM budget (double-buffered blocks + weights + elementwise temporaries), with headroom,
    # capped below v7x's 64 MiB per-TC VMEM.
    bf = 4
    enc_blk = TB * S * H * bf
    in_blk = TB * K * bf
    out_blk = TB * 2 * H * bf
    w_bytes = (2 * H * H + 2 * H + H * 4 * H + (H + Din) * 4 * H + 4 * H) * bf
    interm = 3 * TB * S * H * bf
    need = 2 * (enc_blk + in_blk + out_blk) + 2 * w_bytes + interm
    vmem_limit = int(min(max(4 * need, 8 << 20), 48 << 20))

    grid_spec = pltpu.PrefetchScalarGridSpec(
        num_scalar_prefetch=0,
        grid=(nb,),
        in_specs=[
            pl.BlockSpec((TB, K), lambda b: (b, 0)),         # [h | x | c]
            pl.BlockSpec((TB, S, H), lambda b: (b, 0, 0)),   # encoder outputs
            pl.BlockSpec((H, H), lambda b: (0, 0)),          # wa1h
            pl.BlockSpec((H, H), lambda b: (0, 0)),          # wa1e
            pl.BlockSpec((1, H), lambda b: (0, 0)),          # ba1
            pl.BlockSpec((1, H), lambda b: (0, 0)),          # wa2 row
            pl.BlockSpec((H, 4 * H), lambda b: (0, 0)),      # ctx gate weight
            pl.BlockSpec((H + Din, 4 * H), lambda b: (0, 0)),  # [h|x] gate weight
            pl.BlockSpec((1, 4 * H), lambda b: (0, 0)),      # fused lstm bias
        ],
        out_specs=pl.BlockSpec((TB, 2 * H), lambda b: (b, 0)),   # [h_new | c_new] slab
    )

    hc = pl.pallas_call(
        _decoder_kernel,
        out_shape=jax.ShapeDtypeStruct((B, 2 * H), f32),
        grid_spec=grid_spec,
        compiler_params=pltpu.CompilerParams(
            dimension_semantics=("parallel",),
            vmem_limit_bytes=vmem_limit),
    )(hxc, enc,
      packed['wa1h'], packed['wa1e'], packed['ba1'], packed['wa2'],
      packed['wc'], packed['whx'], packed['b_lstm'])

    h_new = hc[:, :H]
    c_new = hc[:, H:]
    # dec_output of a single-step batch_first LSTM equals the new hidden state.
    return h_new[:, None, :], h_new[None, :, :], c_new[None, :, :]


def decoder_forward(packed, inp, hidden, cell, enc):
    """Matches Decoder.forward: returns dec_output only."""
    return decoder_step(packed, inp, hidden, cell, enc)[0]


def decoder_reference(params, inp, hidden, cell, enc):
    """Pure-JAX mirror of the PyTorch forward, for correctness checking."""
    B, S, H = enc.shape
    h0, c0 = hidden[0], cell[0]                                          # (B, H)
    hidden_rep = jnp.broadcast_to(h0[:, None, :], (B, S, H))
    cat = jnp.concatenate([hidden_rep, enc], axis=2)                     # (B, S, 2H)
    e1 = jnp.tanh(cat @ params['attn_w1'].T + params['attn_b1'])
    energy = e1 @ params['attn_w2'].T + params['attn_b2']                # (B, S, 1)
    w = jax.nn.softmax(energy, axis=1)
    ctx = jnp.sum(w * enc, axis=1, keepdims=True)                        # (B, 1, H)
    lstm_in = jnp.concatenate([inp, ctx], axis=2)[:, 0, :]               # (B, Din+H)
    gates = (lstm_in @ params['w_ih'].T + params['b_ih']
             + h0 @ params['w_hh'].T + params['b_hh'])                   # (B, 4H)
    i_g = jax.nn.sigmoid(gates[:, :H])
    f_g = jax.nn.sigmoid(gates[:, H:2 * H])
    g_g = jnp.tanh(gates[:, 2 * H:3 * H])
    o_g = jax.nn.sigmoid(gates[:, 3 * H:])
    c_new = f_g * c0 + i_g * g_g
    h_new = o_g * jnp.tanh(c_new)
    return h_new[:, None, :], h_new[None, :, :], c_new[None, :, :]


if __name__ == "__main__":
    B, S, H, Din = 2, 8, 32, 1

    key = jax.random.PRNGKey(0)
    kp, ki, kh, kc, ke = jax.random.split(key, 5)
    params = init_params(kp, input_size=Din, hidden_size=H)
    packed = prepack_params(params, input_size=Din)          # one-time prepack

    inp = jax.random.normal(ki, (B, 1, Din), jnp.float32)     # decoder step input
    hidden = jax.random.normal(kh, (1, B, H), jnp.float32)    # LSTM hidden state
    cell = jax.random.normal(kc, (1, B, H), jnp.float32)      # LSTM cell state
    enc = jax.random.normal(ke, (B, S, H), jnp.float32)       # encoder outputs

    out, h_new, c_new = decoder_step(packed, inp, hidden, cell, enc)
    out = jax.block_until_ready(out)

    ref_out, ref_h, ref_c = decoder_reference(params, inp, hidden, cell, enc)
    assert out.shape == (B, 1, H), out.shape
    assert jnp.allclose(out, ref_out, rtol=1e-5, atol=1e-5), float(jnp.max(jnp.abs(out - ref_out)))
    assert jnp.allclose(h_new, ref_h, rtol=1e-5, atol=1e-5)
    assert jnp.allclose(c_new, ref_c, rtol=1e-5, atol=1e-5)

    # module-semantics entry point (dec_output only)
    out2 = jax.block_until_ready(decoder_forward(packed, inp, hidden, cell, enc))
    assert jnp.allclose(out2, ref_out, rtol=1e-5, atol=1e-5)

    print("KERNEL_OK")
</pallas_src>

<mosaic_0001>
module attributes {stable_mosaic.version = 11 : i64} {
  func.func @_decoder_kernel(%arg0: i32, %arg1: memref<2x65xf32, #tpu.memory_space<vmem>>, %arg2: memref<2x8x32xf32, #tpu.memory_space<vmem>>, %arg3: memref<32x32xf32, #tpu.memory_space<vmem>>, %arg4: memref<32x32xf32, #tpu.memory_space<vmem>>, %arg5: memref<1x32xf32, #tpu.memory_space<vmem>>, %arg6: memref<1x32xf32, #tpu.memory_space<vmem>>, %arg7: memref<32x128xf32, #tpu.memory_space<vmem>>, %arg8: memref<33x128xf32, #tpu.memory_space<vmem>>, %arg9: memref<1x128xf32, #tpu.memory_space<vmem>>, %arg10: memref<2x64xf32, #tpu.memory_space<vmem>>) attributes {dimension_semantics = [#tpu.dimension_semantics<parallel>], iteration_bounds = array<i64: 1>, scalar_prefetch = 0 : i64, scratch_operands = 0 : i64, tpu.core_type = #tpu.core_type<tc>, window_params = [{transform_indices = @transform_0, window_bounds = array<i64: 2, 65>}, {transform_indices = @transform_1, window_bounds = array<i64: 2, 8, 32>}, {pipeline_mode = #tpu.pipeline_mode<synchronous>, transform_indices = @transform_2, window_bounds = array<i64: 32, 32>}, {pipeline_mode = #tpu.pipeline_mode<synchronous>, transform_indices = @transform_3, window_bounds = array<i64: 32, 32>}, {pipeline_mode = #tpu.pipeline_mode<synchronous>, transform_indices = @transform_4, window_bounds = array<i64: 1, 32>}, {pipeline_mode = #tpu.pipeline_mode<synchronous>, transform_indices = @transform_5, window_bounds = array<i64: 1, 32>}, {pipeline_mode = #tpu.pipeline_mode<synchronous>, transform_indices = @transform_6, window_bounds = array<i64: 32, 128>}, {pipeline_mode = #tpu.pipeline_mode<synchronous>, transform_indices = @transform_7, window_bounds = array<i64: 33, 128>}, {pipeline_mode = #tpu.pipeline_mode<synchronous>, transform_indices = @transform_8, window_bounds = array<i64: 1, 128>}, {transform_indices = @transform_9, window_bounds = array<i64: 2, 64>}]} {
    %c0 = arith.constant 0 : index
    %c0_0 = arith.constant 0 : index
    %0 = vector.load %arg1[%c0, %c0_0] : memref<2x65xf32, #tpu.memory_space<vmem>>, vector<2x32xf32>
    %c0_1 = arith.constant 0 : index
    %c0_2 = arith.constant 0 : index
    %1 = vector.load %arg1[%c0_1, %c0_2] : memref<2x65xf32, #tpu.memory_space<vmem>>, vector<2x33xf32>
    %c0_3 = arith.constant 0 : index
    %c33 = arith.constant 33 : index
    %2 = vector.load %arg1[%c0_3, %c33] : memref<2x65xf32, #tpu.memory_space<vmem>>, vector<2x32xf32>
    %c0_4 = arith.constant 0 : index
    %c0_5 = arith.constant 0 : index
    %c0_6 = arith.constant 0 : index
    %3 = vector.load %arg2[%c0_4, %c0_5, %c0_6] : memref<2x8x32xf32, #tpu.memory_space<vmem>>, vector<2x8x32xf32>
    %c0_7 = arith.constant 0 : index
    %c0_8 = arith.constant 0 : index
    %4 = vector.load %arg3[%c0_7, %c0_8] : memref<32x32xf32, #tpu.memory_space<vmem>>, vector<32x32xf32>
    %cst = arith.constant dense<0.000000e+00> : vector<2x32xf32>
    %5 = tpu.matmul %0, %4, %cst {dimension_numbers = #tpu.dot_dimension_numbers<[1], [0], [0], [1], [0, 0, 1, 1], [], []>} : vector<2x32xf32>, vector<32x32xf32>, vector<2x32xf32> -> vector<2x32xf32>
    %c0_9 = arith.constant 0 : index
    %c0_10 = arith.constant 0 : index
    %6 = vector.load %arg5[%c0_9, %c0_10] : memref<1x32xf32, #tpu.memory_space<vmem>>, vector<1x32xf32>
    %7 = vector.broadcast %6 : vector<1x32xf32> to vector<2x32xf32>
    %8 = arith.addf %5, %7 : vector<2x32xf32>
    %9 = vector.shape_cast %3 : vector<2x8x32xf32> to vector<16x32xf32>
    %c0_11 = arith.constant 0 : index
    %c0_12 = arith.constant 0 : index
    %10 = vector.load %arg4[%c0_11, %c0_12] : memref<32x32xf32, #tpu.memory_space<vmem>>, vector<32x32xf32>
    %cst_13 = arith.constant dense<0.000000e+00> : vector<16x32xf32>
    %11 = tpu.matmul %9, %10, %cst_13 {dimension_numbers = #tpu.dot_dimension_numbers<[1], [0], [0], [1], [0, 0, 1, 1], [], []>} : vector<16x32xf32>, vector<32x32xf32>, vector<16x32xf32> -> vector<16x32xf32>
    %12 = vector.shape_cast %11 : vector<16x32xf32> to vector<2x8x32xf32>
    %13 = vector.shape_cast %8 : vector<2x32xf32> to vector<2x1x32xf32>
    %14 = vector.broadcast %13 : vector<2x1x32xf32> to vector<2x8x32xf32>
    %15 = arith.addf %12, %14 : vector<2x8x32xf32>
    %16 = math.tanh %15 : vector<2x8x32xf32>
    %c0_14 = arith.constant 0 : index
    %c0_15 = arith.constant 0 : index
    %17 = vector.load %arg6[%c0_14, %c0_15] : memref<1x32xf32, #tpu.memory_space<vmem>>, vector<1x32xf32>
    %18 = vector.shape_cast %17 : vector<1x32xf32> to vector<1x1x32xf32>
    %19 = vector.broadcast %18 : vector<1x1x32xf32> to vector<2x8x32xf32>
    %20 = arith.mulf %16, %19 : vector<2x8x32xf32>
    %cst_16 = arith.constant dense<0.000000e+00> : vector<2x8xf32>
    %21 = vector.multi_reduction <add>, %20, %cst_16 [2] : vector<2x8x32xf32> to vector<2x8xf32>
    %22 = vector.shape_cast %21 : vector<2x8xf32> to vector<2x8x1xf32>
    %cst_17 = arith.constant dense<0xFF800000> : vector<2x1xf32>
    %23 = vector.multi_reduction <maximumf>, %22, %cst_17 [1] : vector<2x8x1xf32> to vector<2x1xf32>
    %24 = vector.shape_cast %23 : vector<2x1xf32> to vector<2x1x1xf32>
    %25 = vector.broadcast %24 : vector<2x1x1xf32> to vector<2x8x1xf32>
    %26 = arith.subf %22, %25 : vector<2x8x1xf32>
    %27 = math.exp %26 : vector<2x8x1xf32>
    %cst_18 = arith.constant dense<0.000000e+00> : vector<2x1xf32>
    %28 = vector.multi_reduction <add>, %27, %cst_18 [1] : vector<2x8x1xf32> to vector<2x1xf32>
    %29 = vector.shape_cast %28 : vector<2x1xf32> to vector<2x1x1xf32>
    %30 = vector.broadcast %29 : vector<2x1x1xf32> to vector<2x8x1xf32>
    %31 = arith.divf %27, %30 : vector<2x8x1xf32>
    %32 = vector.broadcast %31 : vector<2x8x1xf32> to vector<2x8x32xf32>
    %33 = arith.mulf %32, %3 : vector<2x8x32xf32>
    %cst_19 = arith.constant dense<0.000000e+00> : vector<2x32xf32>
    %34 = vector.multi_reduction <add>, %33, %cst_19 [1] : vector<2x8x32xf32> to vector<2x32xf32>
    %c0_20 = arith.constant 0 : index
    %c0_21 = arith.constant 0 : index
    %35 = vector.load %arg7[%c0_20, %c0_21] : memref<32x128xf32, #tpu.memory_space<vmem>>, vector<32x128xf32>
    %cst_22 = arith.constant dense<0.000000e+00> : vector<2x128xf32>
    %36 = tpu.matmul %34, %35, %cst_22 {dimension_numbers = #tpu.dot_dimension_numbers<[1], [0], [0], [1], [0, 0, 1, 1], [], []>} : vector<2x32xf32>, vector<32x128xf32>, vector<2x128xf32> -> vector<2x128xf32>
    %c0_23 = arith.constant 0 : index
    %c0_24 = arith.constant 0 : index
    %37 = vector.load %arg8[%c0_23, %c0_24] : memref<33x128xf32, #tpu.memory_space<vmem>>, vector<33x128xf32>
    %cst_25 = arith.constant dense<0.000000e+00> : vector<2x128xf32>
    %38 = tpu.matmul %1, %37, %cst_25 {dimension_numbers = #tpu.dot_dimension_numbers<[1], [0], [0], [1], [0, 0, 1, 1], [], []>} : vector<2x33xf32>, vector<33x128xf32>, vector<2x128xf32> -> vector<2x128xf32>
    %39 = arith.addf %36, %38 : vector<2x128xf32>
    %c0_26 = arith.constant 0 : index
    %c0_27 = arith.constant 0 : index
    %40 = vector.load %arg9[%c0_26, %c0_27] : memref<1x128xf32, #tpu.memory_space<vmem>>, vector<1x128xf32>
    %41 = vector.broadcast %40 : vector<1x128xf32> to vector<2x128xf32>
    %42 = arith.addf %39, %41 : vector<2x128xf32>
    %43 = vector.extract_strided_slice %42 {offsets = [0, 0], sizes = [2, 32], strides = [1, 1]} : vector<2x128xf32> to vector<2x32xf32>
    %44 = arith.negf %43 : vector<2x32xf32>
    %45 = math.exp %44 : vector<2x32xf32>
    %cst_28 = arith.constant 1.000000e+00 : f32
    %46 = vector.broadcast %cst_28 : f32 to vector<2x32xf32>
    %47 = arith.addf %46, %45 : vector<2x32xf32>
    %48 = arith.divf %46, %47 : vector<2x32xf32>
    %49 = vector.extract_strided_slice %42 {offsets = [0, 32], sizes = [2, 32], strides = [1, 1]} : vector<2x128xf32> to vector<2x32xf32>
    %50 = arith.negf %49 : vector<2x32xf32>
    %51 = math.exp %50 : vector<2x32xf32>
    %cst_29 = arith.constant 1.000000e+00 : f32
    %52 = vector.broadcast %cst_29 : f32 to vector<2x32xf32>
    %53 = arith.addf %52, %51 : vector<2x32xf32>
    %54 = arith.divf %52, %53 : vector<2x32xf32>
    %55 = vector.extract_strided_slice %42 {offsets = [0, 64], sizes = [2, 32], strides = [1, 1]} : vector<2x128xf32> to vector<2x32xf32>
    %56 = math.tanh %55 : vector<2x32xf32>
    %57 = vector.extract_strided_slice %42 {offsets = [0, 96], sizes = [2, 32], strides = [1, 1]} : vector<2x128xf32> to vector<2x32xf32>
    %58 = arith.negf %57 : vector<2x32xf32>
    %59 = math.exp %58 : vector<2x32xf32>
    %cst_30 = arith.constant 1.000000e+00 : f32
    %60 = vector.broadcast %cst_30 : f32 to vector<2x32xf32>
    %61 = arith.addf %60, %59 : vector<2x32xf32>
    %62 = arith.divf %60, %61 : vector<2x32xf32>
    %63 = arith.mulf %54, %2 : vector<2x32xf32>
    %64 = arith.mulf %48, %56 : vector<2x32xf32>
    %65 = arith.addf %63, %64 : vector<2x32xf32>
    %66 = math.tanh %65 : vector<2x32xf32>
    %67 = arith.mulf %62, %66 : vector<2x32xf32>
    %68 = tpu.concatenate %67, %65 in 1 : vector<2x32xf32>, vector<2x32xf32> -> vector<2x64xf32>
    %c0_31 = arith.constant 0 : index
    %c0_32 = arith.constant 0 : index
    %69 = vector.load %arg10[%c0_31, %c0_32] : memref<2x64xf32, #tpu.memory_space<vmem>>, vector<2x64xf32>
    tpu.vector_store %arg10[%c0_31, %c0_32], %68 {strides = array<i32>} : memref<2x64xf32, #tpu.memory_space<vmem>>, vector<2x64xf32>,
    return
  }
  func.func @transform_0(%arg0: i32) -> (i32, i32) {
    %c0_i32 = arith.constant 0 : i32
    %c0_i32_0 = arith.constant 0 : i32
    return %arg0, %c0_i32 : i32, i32
  }
  func.func @transform_1(%arg0: i32) -> (i32, i32, i32) {
    %c0_i32 = arith.constant 0 : i32
    %c0_i32_0 = arith.constant 0 : i32
    %c0_i32_1 = arith.constant 0 : i32
    return %arg0, %c0_i32, %c0_i32_0 : i32, i32, i32
  }
  func.func @transform_2(%arg0: i32) -> (i32, i32) {
    %c0_i32 = arith.constant 0 : i32
    %c0_i32_0 = arith.constant 0 : i32
    %c0_i32_1 = arith.constant 0 : i32
    return %c0_i32, %c0_i32_0 : i32, i32
  }
  func.func @transform_3(%arg0: i32) -> (i32, i32) {
    %c0_i32 = arith.constant 0 : i32
    %c0_i32_0 = arith.constant 0 : i32
    %c0_i32_1 = arith.constant 0 : i32
    return %c0_i32, %c0_i32_0 : i32, i32
  }
  func.func @transform_4(%arg0: i32) -> (i32, i32) {
    %c0_i32 = arith.constant 0 : i32
    %c0_i32_0 = arith.constant 0 : i32
    %c0_i32_1 = arith.constant 0 : i32
    return %c0_i32, %c0_i32_0 : i32, i32
  }
  func.func @transform_5(%arg0: i32) -> (i32, i32) {
    %c0_i32 = arith.constant 0 : i32
    %c0_i32_0 = arith.constant 0 : i32
    %c0_i32_1 = arith.constant 0 : i32
    return %c0_i32, %c0_i32_0 : i32, i32
  }
  func.func @transform_6(%arg0: i32) -> (i32, i32) {
    %c0_i32 = arith.constant 0 : i32
    %c0_i32_0 = arith.constant 0 : i32
    %c0_i32_1 = arith.constant 0 : i32
    return %c0_i32, %c0_i32_0 : i32, i32
  }
  func.func @transform_7(%arg0: i32) -> (i32, i32) {
    %c0_i32 = arith.constant 0 : i32
    %c0_i32_0 = arith.constant 0 : i32
    %c0_i32_1 = arith.constant 0 : i32
    return %c0_i32, %c0_i32_0 : i32, i32
  }
  func.func @transform_8(%arg0: i32) -> (i32, i32) {
    %c0_i32 = arith.constant 0 : i32
    %c0_i32_0 = arith.constant 0 : i32
    %c0_i32_1 = arith.constant 0 : i32
    return %c0_i32, %c0_i32_0 : i32, i32
  }
  func.func @transform_9(%arg0: i32) -> (i32, i32) {
    %c0_i32 = arith.constant 0 : i32
    %c0_i32_0 = arith.constant 0 : i32
    return %arg0, %c0_i32 : i32, i32
  }
}

</mosaic_0001>

<llo_original>
// kernel: decoder_step.1
$region0: #{decoder_step.1}
  #allocation0 [shape = 'u32[]', space=smem, size = 0x4, offset = 0x4, fixed_abs, tag = 'smem constant byte address 0x4 - core index']
  #allocation1 [shape = 'u32[144,128]{1,0:T(1,128)}', space=vmem, size = 0x12000, scoped, tag = 'internal scratch']
  %s0 = inlined_call_operand.vmem [shape: f32[2,65], index: 0, kind: input, shape index: {}]
  %s1 = inlined_call_operand.vmem [shape: f32[2,8,32], index: 1, kind: input, shape index: {}]
  %s2 = inlined_call_operand.hbm [shape: f32[32,32], index: 2, kind: input, shape index: {}]
  %s3 = inlined_call_operand.hbm [shape: f32[32,32], index: 3, kind: input, shape index: {}]
  %s4 = inlined_call_operand.vmem [shape: f32[1,32], index: 4, kind: input, shape index: {}]
  %s5 = inlined_call_operand.hbm [shape: f32[1,32], index: 5, kind: input, shape index: {}]
  %s6 = inlined_call_operand.hbm [shape: f32[32,128], index: 6, kind: input, shape index: {}]
  %s7 = inlined_call_operand.vmem [shape: f32[33,128], index: 7, kind: input, shape index: {}]
  %s8 = inlined_call_operand.hbm [shape: f32[1,128], index: 8, kind: input, shape index: {}]
  %s9 = inlined_call_operand.vmem [shape: f32[2,64], index: 9, kind: output, shape index: {}]
  %s10 = sld [smem:[#allocation0]]
  $region66: #{decoder_step.1} parent=0
    _
  %s12 = ssub.s32 1, %s10
  %s13 = scalar_select 0, %s12, %s10
  $region1: #{decoder_step.1} parent=0
    #allocation2 [shape = 'u8[16384]{0}', space=vmem, size = 0x4000, scoped, tag = 'input window, operand 2, single buffered']
    #allocation3 [shape = 's32[1]{0}', space=sflag, size = 0x4, scoped, tag = 'scoped memory for decoder_step.1']
    #allocation4 [shape = 'u8[16384]{0}', space=vmem, size = 0x4000, scoped, tag = 'input window, operand 3, single buffered']
    #allocation5 [shape = 's32[1]{0}', space=sflag, size = 0x4, scoped, tag = 'scoped memory for decoder_step.1']
    #allocation6 [shape = 'u8[512]{0}', space=vmem, size = 0x400, scoped, tag = 'input window, operand 5, single buffered']
    #allocation7 [shape = 'u8[16384]{0}', space=vmem, size = 0x4000, scoped, tag = 'input window, operand 6, single buffered']
    #allocation8 [shape = 's32[1]{0}', space=sflag, size = 0x4, scoped, tag = 'scoped memory for decoder_step.1']
    #allocation9 [shape = 'u8[512]{0}', space=vmem, size = 0x400, scoped, tag = 'input window, operand 8, single buffered']
    %14 = vsyncpa [#allocation3], 0
    %15 = vsyncpa [#allocation5], 0
    %16 = vsyncpa [#allocation8], 0
    // Predicated region
    $region2: #{decoder_step.1} parent=1 // pred_check
      _
    $region3: #{decoder_step.1} parent=1 // pred_check_branch
      %18 = sbr.rel (0) target = $region5
    $region4: #{decoder_step.1} parent=1 // pred_region
      _
    $region5: #{decoder_step.1} parent=1 // pred_fallthru
      _
    // Predicated region
    $region6: #{decoder_step.1} parent=1 // pred_check
      _
    $region7: #{decoder_step.1} parent=1 // pred_check_branch
      %20 = sbr.rel (0) target = $region9
    $region8: #{decoder_step.1} parent=1 // pred_region
      _
    $region9: #{decoder_step.1} parent=1 // pred_fallthru
      _
    // Predicated region
    $region10: #{decoder_step.1} parent=1 // pred_check
      _
    $region11: #{decoder_step.1} parent=1 // pred_check_branch
      %22 = sbr.rel (0) target = $region13
    $region12: #{decoder_step.1} parent=1 // pred_region
      %s24 = ssub.s32 512, 512
      %25 = vsyncadd [#allocation3], %s24
      %s26 = sshll.u32 [#allocation2], 4
      %s27 = int_to_ptr.vmem [resolvable:$true] %s26
      %32 = dma.hbm_to_vmem [thread:$0]  %s2, 512, %s27, [#allocation3], 128, 128, 8
    $region13: #{decoder_step.1} parent=1 // pred_fallthru
      _
    // Predicated region
    $region14: #{decoder_step.1} parent=1 // pred_check
      _
    $region15: #{decoder_step.1} parent=1 // pred_check_branch
      %34 = sbr.rel (0) target = $region17
    $region16: #{decoder_step.1} parent=1 // pred_region
      %s36 = ssub.s32 512, 512
      %37 = vsyncadd [#allocation5], %s36
      %s38 = sshll.u32 [#allocation4], 4
      %s39 = int_to_ptr.vmem [resolvable:$true] %s38
      %44 = dma.hbm_to_vmem [thread:$0]  %s3, 512, %s39, [#allocation5], 128, 128, 8
    $region17: #{decoder_step.1} parent=1 // pred_fallthru
      _
    // Predicated region
    $region18: #{decoder_step.1} parent=1 // pred_check
      _
    $region19: #{decoder_step.1} parent=1 // pred_check_branch
      %46 = sbr.rel (0) target = $region21
    $region20: #{decoder_step.1} parent=1 // pred_region
      _
    $region21: #{decoder_step.1} parent=1 // pred_fallthru
      _
    // Predicated region
    $region22: #{decoder_step.1} parent=1 // pred_check
      _
    $region23: #{decoder_step.1} parent=1 // pred_check_branch
      %48 = sbr.rel (0) target = $region25
    $region24: #{decoder_step.1} parent=1 // pred_region
      %s50 = ssub.s32 16, 16
      %51 = vsyncadd [#allocation5], %s50
      %s53 = sshll.u32 [#allocation6], 4
      %s54 = int_to_ptr.vmem [resolvable:$true] %s53
      %56 = dma.hbm_to_vmem [thread:$0]  %s5, 16, %s54, [#allocation5]
    $region25: #{decoder_step.1} parent=1 // pred_fallthru
      _
    // Predicated region
    $region26: #{decoder_step.1} parent=1 // pred_check
      _
    $region27: #{decoder_step.1} parent=1 // pred_check_branch
      %58 = sbr.rel (0) target = $region29
    $region28: #{decoder_step.1} parent=1 // pred_region
      %s60 = ssub.s32 512, 512
      %61 = vsyncadd [#allocation8], %s60
      %s62 = sshll.u32 [#allocation7], 4
      %s63 = int_to_ptr.vmem [resolvable:$true] %s62
      %68 = dma.hbm_to_vmem [thread:$0]  %s6, 512, %s63, [#allocation8], 128, 128, 8
    $region29: #{decoder_step.1} parent=1 // pred_fallthru
      _
    // Predicated region
    $region30: #{decoder_step.1} parent=1 // pred_check
      _
    $region31: #{decoder_step.1} parent=1 // pred_check_branch
      %70 = sbr.rel (0) target = $region33
    $region32: #{decoder_step.1} parent=1 // pred_region
      _
    $region33: #{decoder_step.1} parent=1 // pred_fallthru
      _
    // Predicated region
    $region34: #{decoder_step.1} parent=1 // pred_check
      _
    $region35: #{decoder_step.1} parent=1 // pred_check_branch
      %72 = sbr.rel (0) target = $region37
    $region36: #{decoder_step.1} parent=1 // pred_region
      %s74 = ssub.s32 16, 16
      %75 = vsyncadd [#allocation8], %s74
      %s77 = sshll.u32 [#allocation9], 4
      %s78 = int_to_ptr.vmem [resolvable:$true] %s77
      %80 = dma.hbm_to_vmem [thread:$0]  %s8, 16, %s78, [#allocation8]
    $region37: #{decoder_step.1} parent=1 // pred_fallthru
      _
    // Predicated region
    $region38: #{decoder_step.1} parent=1 // pred_check
      _
    $region39: #{decoder_step.1} parent=1 // pred_check_branch
      %82 = sbr.rel (0) target = $region41
    $region40: #{decoder_step.1} parent=1 // pred_region
      %83 = dma.done [#allocation3], 512
    $region41: #{decoder_step.1} parent=1 // pred_fallthru
      _
    // Predicated region
    $region42: #{decoder_step.1} parent=1 // pred_check
      _
    $region43: #{decoder_step.1} parent=1 // pred_check_branch
      %85 = sbr.rel (0) target = $region45
    $region44: #{decoder_step.1} parent=1 // pred_region
      %86 = dma.done [#allocation5], 512
    $region45: #{decoder_step.1} parent=1 // pred_fallthru
      _
    // Predicated region
    $region46: #{decoder_step.1} parent=1 // pred_check
      _
    $region47: #{decoder_step.1} parent=1 // pred_check_branch
      %88 = sbr.rel (0) target = $region49
    $region48: #{decoder_step.1} parent=1 // pred_region
      %89 = dma.done [#allocation5], 16
    $region49: #{decoder_step.1} parent=1 // pred_fallthru
      _
    // Predicated region
    $region50: #{decoder_step.1} parent=1 // pred_check
      _
    $region51: #{decoder_step.1} parent=1 // pred_check_branch
      %91 = sbr.rel (0) target = $region53
    $region52: #{decoder_step.1} parent=1 // pred_region
      %92 = dma.done [#allocation8], 512
    $region53: #{decoder_step.1} parent=1 // pred_fallthru
      _
    // Predicated region
    $region54: #{decoder_step.1} parent=1 // pred_check
      _
    $region55: #{decoder_step.1} parent=1 // pred_check_branch
      %94 = sbr.rel (0) target = $region57
    $region56: #{decoder_step.1} parent=1 // pred_region
      %95 = dma.done [#allocation8], 16
    $region57: #{decoder_step.1} parent=1 // pred_fallthru
      _
    %v96 = vld [vmem:[%s0] sm:$0x3]
    %v97 = vld [vmem:[%s1] sm:$0xff]
    %v98 = vld [vmem:[%s1 + $0x8] sm:$0xff]
    %v99 = vld [vmem:[#allocation2] sm:$0xff]
    %v100 = vld [vmem:[#allocation2 + $0x8] sm:$0xff]
    %v101 = vld [vmem:[#allocation2 + $0x10] sm:$0xff]
    %v102 = vld [vmem:[#allocation2 + $0x18] sm:$0xff]
    %v103 = vld [vmem:[%s4] sm:$0x1]
    %v105 = vlaneseq
    %v106 = vshrl.u32 %v105, 7
    %v107 = vsub.s32 0, %v106
    %v108 = vrot.slane %v103, %v107
    %vm110 = vcmask 261120
    %v112 = vsel %vm110, %v96, 0
    %114 = vmatprep.subr.mxu0 0.0
    %115 = vmatpush1.msra.mxu0 %v99
    %116 = vmatprep.subr.mxu0 0.0
    %117 = vmatpush1.msra.mxu0 %v100
    %118 = vmatprep.subr.mxu0 0.0
    %119 = vmatpush1.msra.mxu0 %v101
    %120 = vmatprep.subr.mxu0 0.0
    %121 = vmatpush1.msra.mxu0 %v102
    %122 = vmatprep.subr.mxu0 0.0
    %123 = vmatpush1.msra.mxu0 0.0
    %124 = vmatprep.subr.mxu0 0.0
    %125 = vmatpush1.msra.mxu0 0.0
    %126 = vmatprep.subr.mxu0 0.0
    %127 = vmatpush1.msra.mxu0 0.0
    %128 = vmatprep.subr.mxu0 0.0
    %129 = vmatpush1.msra.mxu0 0.0
    %130 = vmatprep.subr.mxu0 0.0
    %131 = vmatpush1.msra.mxu0 0.0
    %132 = vmatprep.subr.mxu0 0.0
    %133 = vmatpush1.msra.mxu0 0.0
    %134 = vmatprep.subr.mxu0 0.0
    %135 = vmatpush1.msra.mxu0 0.0
    %136 = vmatprep.subr.mxu0 0.0
    %137 = vmatpush1.msra.mxu0 0.0
    %138 = vmatprep.subr.mxu0 0.0
    %139 = vmatpush1.msra.mxu0 0.0
    %140 = vmatprep.subr.mxu0 0.0
    %141 = vmatpush1.msra.mxu0 0.0
    %142 = vmatprep.subr.mxu0 0.0
    %143 = vmatpush1.msra.mxu0 0.0
    %144 = vmatprep.subr.mxu0 0.0
    %145 = vmatpush1.msra.mxu0 0.0
    %146 = vmatprep.subr.mxu0 0.0
    %147 = vmatpush1.msra.mxu0 0.0
    %148 = vmatprep.subr.mxu0 0.0
    %149 = vmatpush1.msra.mxu0 0.0
    %150 = vmatprep.subr.mxu0 0.0
    %151 = vmatpush1.msra.mxu0 0.0
    %152 = vmatprep.subr.mxu0 0.0
    %153 = vmatpush1.msra.mxu0 0.0
    %154 = vmatprep.subr.mxu0 0.0
    %155 = vmatpush1.msra.mxu0 0.0
    %156 = vmatprep.subr.mxu0 0.0
    %157 = vmatpush1.msra.mxu0 0.0
    %158 = vmatprep.subr.mxu0 0.0
    %159 = vmatpush1.msra.mxu0 0.0
    %160 = vmatprep.subr.mxu0 0.0
    %161 = vmatpush1.msra.mxu0 0.0
    %162 = vmatprep.subr.mxu0 0.0
    %163 = vmatpush1.msra.mxu0 0.0
    %164 = vmatprep.subr.mxu0 0.0
    %165 = vmatpush1.msra.mxu0 0.0
    %166 = vmatprep.subr.mxu0 0.0
    %167 = vmatpush1.msra.mxu0 0.0
    %168 = vmatprep.subr.mxu0 0.0
    %169 = vmatpush1.msra.mxu0 0.0
    %170 = vmatprep.subr.mxu0 0.0
    %171 = vmatpush1.msra.mxu0 0.0
    %172 = vmatprep.subr.mxu0 0.0
    %173 = vmatpush1.msra.mxu0 0.0
    %174 = vmatprep.subr.mxu0 0.0
    %175 = vmatpush1.msra.mxu0 0.0
    %176 = vmatprep.subr.mxu0 0.0
    %177 = vmatpush1.msra.mxu0 0.0
    %178 = vmatprep.mubr.f32.mxu0 0.0
    %179 = vmatmul.mubr.f32.gmra.mrb[0].mxu0 %v112
    %v180 = vpop.f32.mrb[0].mxu0
    %v181 = vadd.f32 %v108, %v180
    %v182 = vpop.f32.mrb[0].mxu0
    %183 = vdwg.mxu0
    %v184 = vld [vmem:[#allocation4] sm:$0xff]
    %v185 = vld [vmem:[#allocation4 + $0x8] sm:$0xff]
    %v186 = vld [vmem:[#allocation4 + $0x10] sm:$0xff]
    %v187 = vld [vmem:[#allocation4 + $0x18] sm:$0xff]
    %v189 = vsel %vm110, %v97, 0
    %v192 = vsel %vm110, %v98, 0
    %194 = vmatprep.subr.mxu0 0.0
    %195 = vmatpush1.msra.mxu0 %v184
    %196 = vmatprep.subr.mxu0 0.0
    %197 = vmatpush1.msra.mxu0 %v185
    %198 = vmatprep.subr.mxu0 0.0
    %199 = vmatpush1.msra.mxu0 %v186
    %200 = vmatprep.subr.mxu0 0.0
    %201 = vmatpush1.msra.mxu0 %v187
    %202 = vmatprep.subr.mxu0 0.0
    %203 = vmatpush1.msra.mxu0 0.0
    %204 = vmatprep.subr.mxu0 0.0
    %205 = vmatpush1.msra.mxu0 0.0
    %206 = vmatprep.subr.mxu0 0.0
    %207 = vmatpush1.msra.mxu0 0.0
    %208 = vmatprep.subr.mxu0 0.0
    %209 = vmatpush1.msra.mxu0 0.0
    %210 = vmatprep.subr.mxu0 0.0
    %211 = vmatpush1.msra.mxu0 0.0
    %212 = vmatprep.subr.mxu0 0.0
    %213 = vmatpush1.msra.mxu0 0.0
    %214 = vmatprep.subr.mxu0 0.0
    %215 = vmatpush1.msra.mxu0 0.0
    %216 = vmatprep.subr.mxu0 0.0
    %217 = vmatpush1.msra.mxu0 0.0
    %218 = vmatprep.subr.mxu0 0.0
    %219 = vmatpush1.msra.mxu0 0.0
    %220 = vmatprep.subr.mxu0 0.0
    %221 = vmatpush1.msra.mxu0 0.0
    %222 = vmatprep.subr.mxu0 0.0
    %223 = vmatpush1.msra.mxu0 0.0
    %224 = vmatprep.subr.mxu0 0.0
    %225 = vmatpush1.msra.mxu0 0.0
    %226 = vmatprep.subr.mxu0 0.0
    %227 = vmatpush1.msra.mxu0 0.0
    %228 = vmatprep.subr.mxu0 0.0
    %229 = vmatpush1.msra.mxu0 0.0
    %230 = vmatprep.subr.mxu0 0.0
    %231 = vmatpush1.msra.mxu0 0.0
    %232 = vmatprep.subr.mxu0 0.0
    %233 = vmatpush1.msra.mxu0 0.0
    %234 = vmatprep.subr.mxu0 0.0
    %235 = vmatpush1.msra.mxu0 0.0
    %236 = vmatprep.subr.mxu0 0.0
    %237 = vmatpush1.msra.mxu0 0.0
    %238 = vmatprep.subr.mxu0 0.0
    %239 = vmatpush1.msra.mxu0 0.0
    %240 = vmatprep.subr.mxu0 0.0
    %241 = vmatpush1.msra.mxu0 0.0
    %242 = vmatprep.subr.mxu0 0.0
    %243 = vmatpush1.msra.mxu0 0.0
    %244 = vmatprep.subr.mxu0 0.0
    %245 = vmatpush1.msra.mxu0 0.0
    %246 = vmatprep.subr.mxu0 0.0
    %247 = vmatpush1.msra.mxu0 0.0
    %248 = vmatprep.subr.mxu0 0.0
    %249 = vmatpush1.msra.mxu0 0.0
    %250 = vmatprep.subr.mxu0 0.0
    %251 = vmatpush1.msra.mxu0 0.0
    %252 = vmatprep.subr.mxu0 0.0
    %253 = vmatpush1.msra.mxu0 0.0
    %254 = vmatprep.subr.mxu0 0.0
    %255 = vmatpush1.msra.mxu0 0.0
    %256 = vmatprep.subr.mxu0 0.0
    %257 = vmatpush1.msra.mxu0 0.0
    %258 = vmatprep.mubr.f32.mxu0 0.0
    %259 = vmatmul.mubr.f32.gmra.mrb[0].mxu0 %v189
    %v260 = vpop.f32.mrb[0].mxu0
    %v261 = vadd.f32 0.0, %v260
    %v262 = vpop.f32.mrb[0].mxu0
    %263 = vmatprep.mubr.f32.mxu0 0.0
    %264 = vmatmul.mubr.f32.gmra.mrb[0].mxu0 %v192
    %v265 = vpop.f32.mrb[0].mxu0
    %v266 = vadd.f32 0.0, %v265
    %v267 = vpop.f32.mrb[0].mxu0
    %268 = vdwg.mxu0
    %v271 = vunpack.c.l.s4 1966171168
    %v272 = vunpack.c.0.s8 %v271
    %v273 = vlaneseq
    %v274 = vshrl.u32 %v273, 7
    %v275 = vsub.s32 %v272, %v274
    %v276 = vrot.slane %v181, %v275
    %v277 = vcombine.high %v276, %v276
    %v279 = vunpack.c.l.s4 1966171168
    %v280 = vunpack.c.0.s8 %v279
    %v281 = vlaneseq
    %v282 = vshrl.u32 %v281, 7
    %v283 = vsub.s32 %v280, %v282
    %v284 = vrot.slane %v276, %v283
    %v286 = vunpack.c.l.s4 1966171168
    %v287 = vunpack.c.0.s8 %v286
    %v288 = vlaneseq
    %v289 = vshrl.u32 %v288, 7
    %v290 = vsub.s32 %v287, %v289
    %v291 = vrot.slane %v277, %v290
    %v292 = vlaneseq
    %v293 = vshrl.u32 %v292, 7
    %v294 = vsub.s32 0, %v293
    %v295 = vrot.slane %v284, %v294
    %v296 = vlaneseq
    %v297 = vshrl.u32 %v296, 7
    %v298 = vsub.s32 0, %v297
    %v299 = vrot.slane %v291, %v298
    %v302 = vadd.f32 %v261, %v295
    %v303 = vadd.f32 %v266, %v299
    %v304 = vtanh.pop %v302
    %v305 = vtanh.pop %v303
    %v306 = vld [vmem:[#allocation6] sm:$0x1]
    %v308 = vlaneseq
    %v309 = vshrl.u32 %v308, 7
    %v310 = vsub.s32 0, %v309
    %v311 = vrot.slane %v306, %v310
    %v313 = vmul.f32 %v304, %v311
    %v314 = vmul.f32 %v305, %v311
    %v315 = vsel %vm110, %v313, 0.0
    %316 = vadd.xlane.f32.xlu0 %v315
    %v317 = vpop.xlane.xlu0 %316
    %v318 = vsel %vm110, %v314, 0.0
    %319 = vadd.xlane.f32.xlu0 %v318
    %v320 = vpop.xlane.xlu0 %319
    %v321 = vrot.slane %v317, 4
    %v322 = vmax.f32 %v317, %v321
    %v323 = vrot.slane %v322, 2
    %v324 = vmax.f32 %v322, %v323
    %v325 = vrot.slane %v324, 1
    %v326 = vmax.f32 %v324, %v325
    %v327 = vrot.slane %v320, 4
    %v328 = vmax.f32 %v320, %v327
    %v329 = vrot.slane %v328, 2
    %v330 = vmax.f32 %v328, %v329
    %v331 = vrot.slane %v330, 1
    %v332 = vmax.f32 %v330, %v331
    %v333 = vsub.f32 %v317, %v326
    %v334 = vsub.f32 %v320, %v332
    %v335 = vmul.f32 %v333, 1.442695
    %v336 = vpow.pop %v335
    %v337 = vmul.f32 %v334, 1.442695
    %v338 = vpow.pop %v337
    %v339 = vrot.slane %v336, 4
    %v340 = vadd.f32 %v336, %v339
    %v341 = vrot.slane %v340, 2
    %v342 = vadd.f32 %v340, %v341
    %v343 = vrot.slane %v342, 1
    %v344 = vadd.f32 %v342, %v343
    %v345 = vrot.slane %v338, 4
    %v346 = vadd.f32 %v338, %v345
    %v347 = vrot.slane %v346, 2
    %v348 = vadd.f32 %v346, %v347
    %v349 = vrot.slane %v348, 1
    %v350 = vadd.f32 %v348, %v349
    %v351 = vrcp.pop %v344
    %v352 = vmul.f32 %v336, %v351
    %v353 = vrcp.pop %v350
    %v354 = vmul.f32 %v338, %v353
    %v355 = vmul.f32 %v352, %v97
    %v356 = vmul.f32 %v354, %v98
    %v357 = vsel %vm110, %v355, 0.0
    %v358 = vrot.slane %v357, 4
    %v359 = vadd.f32 %v357, %v358
    %v360 = vrot.slane %v359, 2
    %v361 = vadd.f32 %v359, %v360
    %v362 = vrot.slane %v361, 1
    %v363 = vadd.f32 %v361, %v362
    %v364 = vsel %vm110, %v356, 0.0
    %v365 = vrot.slane %v364, 4
    %v366 = vadd.f32 %v364, %v365
    %v367 = vrot.slane %v366, 2
    %v368 = vadd.f32 %v366, %v367
    %v369 = vrot.slane %v368, 1
    %v370 = vadd.f32 %v368, %v369
    %v371 = vld [vmem:[#allocation7] sm:$0xff]
    %v372 = vld [vmem:[#allocation7 + $0x8] sm:$0xff]
    %v373 = vld [vmem:[#allocation7 + $0x10] sm:$0xff]
    %v374 = vld [vmem:[#allocation7 + $0x18] sm:$0xff]
    %v375 = vld [vmem:[%s7] sm:$0xff]
    %v376 = vld [vmem:[%s7 + $0x8] sm:$0xff]
    %v377 = vld [vmem:[%s7 + $0x10] sm:$0xff]
    %v378 = vld [vmem:[%s7 + $0x18] sm:$0xff]
    %v379 = vld [vmem:[%s7 + $0x20] sm:$0x1]
    %vm380 = vcmask 269312
    %v381 = vsel %vm380, %v96, 0
    %vm383 = vcmask 1040384
    %v385 = vsel %vm383, %v379, 0
    %387 = vmatprep.subr.mxu0 0.0
    %388 = vmatpush1.msra.mxu0 %v375
    %389 = vmatprep.subr.mxu0 0.0
    %390 = vmatpush1.msra.mxu0 %v376
    %391 = vmatprep.subr.mxu0 0.0
    %392 = vmatpush1.msra.mxu0 %v377
    %393 = vmatprep.subr.mxu0 0.0
    %394 = vmatpush1.msra.mxu0 %v378
    %395 = vmatprep.subr.mxu0 0.0
    %396 = vmatpush1.msra.mxu0 %v385
    %397 = vmatprep.subr.mxu0 0.0
    %398 = vmatpush1.msra.mxu0 0.0
    %399 = vmatprep.subr.mxu0 0.0
    %400 = vmatpush1.msra.mxu0 0.0
    %401 = vmatprep.subr.mxu0 0.0
    %402 = vmatpush1.msra.mxu0 0.0
    %403 = vmatprep.subr.mxu0 0.0
    %404 = vmatpush1.msra.mxu0 0.0
    %405 = vmatprep.subr.mxu0 0.0
    %406 = vmatpush1.msra.mxu0 0.0
    %407 = vmatprep.subr.mxu0 0.0
    %408 = vmatpush1.msra.mxu0 0.0
    %409 = vmatprep.subr.mxu0 0.0
    %410 = vmatpush1.msra.mxu0 0.0
    %411 = vmatprep.subr.mxu0 0.0
    %412 = vmatpush1.msra.mxu0 0.0
    %413 = vmatprep.subr.mxu0 0.0
    %414 = vmatpush1.msra.mxu0 0.0
    %415 = vmatprep.subr.mxu0 0.0
    %416 = vmatpush1.msra.mxu0 0.0
    %417 = vmatprep.subr.mxu0 0.0
    %418 = vmatpush1.msra.mxu0 0.0
    %419 = vmatprep.subr.mxu0 0.0
    %420 = vmatpush1.msra.mxu0 0.0
    %421 = vmatprep.subr.mxu0 0.0
    %422 = vmatpush1.msra.mxu0 0.0
    %423 = vmatprep.subr.mxu0 0.0
    %424 = vmatpush1.msra.mxu0 0.0
    %425 = vmatprep.subr.mxu0 0.0
    %426 = vmatpush1.msra.mxu0 0.0
    %427 = vmatprep.subr.mxu0 0.0
    %428 = vmatpush1.msra.mxu0 0.0
    %429 = vmatprep.subr.mxu0 0.0
    %430 = vmatpush1.msra.mxu0 0.0
    %431 = vmatprep.subr.mxu0 0.0
    %432 = vmatpush1.msra.mxu0 0.0
    %433 = vmatprep.subr.mxu0 0.0
    %434 = vmatpush1.msra.mxu0 0.0
    %435 = vmatprep.subr.mxu0 0.0
    %436 = vmatpush1.msra.mxu0 0.0
    %437 = vmatprep.subr.mxu0 0.0
    %438 = vmatpush1.msra.mxu0 0.0
    %439 = vmatprep.subr.mxu0 0.0
    %440 = vmatpush1.msra.mxu0 0.0
    %441 = vmatprep.subr.mxu0 0.0
    %442 = vmatpush1.msra.mxu0 0.0
    %443 = vmatprep.subr.mxu0 0.0
    %444 = vmatpush1.msra.mxu0 0.0
    %445 = vmatprep.subr.mxu0 0.0
    %446 = vmatpush1.msra.mxu0 0.0
    %447 = vmatprep.subr.mxu0 0.0
    %448 = vmatpush1.msra.mxu0 0.0
    %449 = vmatprep.subr.mxu0 0.0
    %450 = vmatpush1.msra.mxu0 0.0
    %451 = vmatprep.mubr.f32.mxu0 0.0
    %452 = vmatmul.mubr.f32.gmra.mrb[0].mxu0 %v381
    %v453 = vpop.f32.mrb[0].mxu0
    %v454 = vadd.f32 0.0, %v453
    %v455 = vpop.f32.mrb[0].mxu0
    %456 = vdwg.mxu0
    %vm459 = vcmask 1041409
    %v460 = vsel %vm459, %v370, %v363
    %v461 = vsel %vm110, %v460, 0
    %463 = vmatprep.subr.mxu0 0.0
    %464 = vmatpush1.msra.mxu0 %v371
    %465 = vmatprep.subr.mxu0 0.0
    %466 = vmatpush1.msra.mxu0 %v372
    %467 = vmatprep.subr.mxu0 0.0
    %468 = vmatpush1.msra.mxu0 %v373
    %469 = vmatprep.subr.mxu0 0.0
    %470 = vmatpush1.msra.mxu0 %v374
    %471 = vmatprep.subr.mxu0 0.0
    %472 = vmatpush1.msra.mxu0 0.0
    %473 = vmatprep.subr.mxu0 0.0
    %474 = vmatpush1.msra.mxu0 0.0
    %475 = vmatprep.subr.mxu0 0.0
    %476 = vmatpush1.msra.mxu0 0.0
    %477 = vmatprep.subr.mxu0 0.0
    %478 = vmatpush1.msra.mxu0 0.0
    %479 = vmatprep.subr.mxu0 0.0
    %480 = vmatpush1.msra.mxu0 0.0
    %481 = vmatprep.subr.mxu0 0.0
    %482 = vmatpush1.msra.mxu0 0.0
    %483 = vmatprep.subr.mxu0 0.0
    %484 = vmatpush1.msra.mxu0 0.0
    %485 = vmatprep.subr.mxu0 0.0
    %486 = vmatpush1.msra.mxu0 0.0
    %487 = vmatprep.subr.mxu0 0.0
    %488 = vmatpush1.msra.mxu0 0.0
    %489 = vmatprep.subr.mxu0 0.0
    %490 = vmatpush1.msra.mxu0 0.0
    %491 = vmatprep.subr.mxu0 0.0
    %492 = vmatpush1.msra.mxu0 0.0
    %493 = vmatprep.subr.mxu0 0.0
    %494 = vmatpush1.msra.mxu0 0.0
    %495 = vmatprep.subr.mxu0 0.0
    %496 = vmatpush1.msra.mxu0 0.0
    %497 = vmatprep.subr.mxu0 0.0
    %498 = vmatpush1.msra.mxu0 0.0
    %499 = vmatprep.subr.mxu0 0.0
    %500 = vmatpush1.msra.mxu0 0.0
    %501 = vmatprep.subr.mxu0 0.0
    %502 = vmatpush1.msra.mxu0 0.0
    %503 = vmatprep.subr.mxu0 0.0
    %504 = vmatpush1.msra.mxu0 0.0
    %505 = vmatprep.subr.mxu0 0.0
    %506 = vmatpush1.msra.mxu0 0.0
    %507 = vmatprep.subr.mxu0 0.0
    %508 = vmatpush1.msra.mxu0 0.0
    %509 = vmatprep.subr.mxu0 0.0
    %510 = vmatpush1.msra.mxu0 0.0
    %511 = vmatprep.subr.mxu0 0.0
    %512 = vmatpush1.msra.mxu0 0.0
    %513 = vmatprep.subr.mxu0 0.0
    %514 = vmatpush1.msra.mxu0 0.0
    %515 = vmatprep.subr.mxu0 0.0
    %516 = vmatpush1.msra.mxu0 0.0
    %517 = vmatprep.subr.mxu0 0.0
    %518 = vmatpush1.msra.mxu0 0.0
    %519 = vmatprep.subr.mxu0 0.0
    %520 = vmatpush1.msra.mxu0 0.0
    %521 = vmatprep.subr.mxu0 0.0
    %522 = vmatpush1.msra.mxu0 0.0
    %523 = vmatprep.subr.mxu0 0.0
    %524 = vmatpush1.msra.mxu0 0.0
    %525 = vmatprep.subr.mxu0 0.0
    %526 = vmatpush1.msra.mxu0 0.0
    %527 = vmatprep.mubr.f32.mxu0 0.0
    %528 = vmatmul.mubr.f32.gmra.mrb[0].mxu0 %v461
    %v529 = vpop.f32.mrb[0].mxu0
    %v530 = vadd.f32 %v454, %v529
    %v531 = vpop.f32.mrb[0].mxu0
    %532 = vdwg.mxu0
    %v533 = vld [vmem:[#allocation9] sm:$0x1]
    %v535 = vlaneseq
    %v536 = vshrl.u32 %v535, 7
    %v537 = vsub.s32 0, %v536
    %v538 = vrot.slane %v533, %v537
    %v540 = vadd.f32 %v530, %v538
    %v541 = vxor.u32 %v540, 2147483648
    %v542 = vmul.f32 %v541, 1.442695
    %v543 = vpow.pop %v542
    %v544 = vadd.f32 %v543, 1.0
    %v545 = vrcp.pop %v544
    %v546 = vmul.f32 1.0, %v545
    %v547 = vtanh.pop %v540
    %548 = vrot.lane.b32.xlu0 %v96, 127
    %v549 = vpop.permute.xlu0 %548
    %v551 = vmul.f32 %v546, %v549
    %553 = vrot.lane.b32.xlu0 %v547, 64
    %v554 = vpop.permute.xlu0 %553
    %v556 = vmul.f32 %v546, %v554
    %558 = vrot.lane.b32.xlu0 %v556, 32
    %v559 = vpop.permute.xlu0 %558
    %v561 = vadd.f32 %v551, %v559
    %v562 = vtanh.pop %v561
    %564 = vrot.lane.b32.xlu0 %v562, 64
    %v565 = vpop.permute.xlu0 %564
    %v567 = vmul.f32 %v546, %v565
    %569 = vrot.lane.b32.xlu0 %v567, 32
    %v570 = vpop.permute.xlu0 %569
    %v572 = vsel %vm110, %v570, %v561
    %vm573 = vcmask 517120
    %574 = vst.msk [vmem:[%s9] sm:$0x3] %vm573, %v572
    // Predicated region
    $region58: #{decoder_step.1} parent=1 // pred_check
      _
    $region59: #{decoder_step.1} parent=1 // pred_check_branch
      %576 = sbr.rel (0) target = $region61
    $region60: #{decoder_step.1} parent=1 // pred_region
      _
    $region61: #{decoder_step.1} parent=1 // pred_fallthru
      _
    // Predicated region
    $region62: #{decoder_step.1} parent=1 // pred_check
      _
    $region63: #{decoder_step.1} parent=1 // pred_check_branch
      %578 = sbr.rel (0) target = $region65
    $region64: #{decoder_step.1} parent=1 // pred_region
      _
    $region65: #{decoder_step.1} parent=1 // pred_fallthru
      _
    %579 = vsyncpa [#allocation3], 1
    %580 = vsyncpa [#allocation5], 1
    %581 = vsyncpa [#allocation8], 1

</llo_original>
